<compile_context>
chip_gen: v5e
topology: v5e:2x2
jax: 0.10.0
libtpu: 0.0.40
codegen_flags: <defaults>
</compile_context>

<pallas_src>
import functools

import jax
import jax.numpy as jnp
from jax.experimental import pallas as pl
from jax.experimental.pallas import tpu as pltpu


def _round_up(x, m):
    return ((x + m - 1) // m) * m


def dagmm_forward_kernel(
    x_ref,                                   # (TB, Dp)   zero-padded input tile
    ew1_ref, eb1_ref, ew2_ref, eb2_ref,      # encoder params (VMEM-resident)
    dw1_ref, db1_ref, dw2_ref, db2_ref,      # decoder params
    sw1_ref, sb1_ref, sw2_ref, sb2_ref,      # estimation params (sw1 zero-padded to SLAB_W rows)
    dec_out,                                 # (TB, Dp)   lane-dense (padded) reconstruction
    slab_out,                                # (TB, SLAB_W) packed [enc | euc | cos | gamma | 0-pad]
    *, E, NG,
):
    x = x_ref[...]

    # ---------------- autoencoder: (Linear -> Tanh -> Linear) x 2 ----------------
    h_enc = jnp.tanh(
        jnp.dot(x, ew1_ref[...], preferred_element_type=jnp.float32) + eb1_ref[...]
    )
    enc = jnp.dot(h_enc, ew2_ref[...], preferred_element_type=jnp.float32) + eb2_ref[...]

    h_dec = jnp.tanh(
        jnp.dot(enc, dw1_ref[...], preferred_element_type=jnp.float32) + db1_ref[...]
    )
    dec = jnp.dot(h_dec, dw2_ref[...], preferred_element_type=jnp.float32) + db2_ref[...]
    dec_out[...] = dec  # padded lanes are exactly 0 (dw2 / db2 zero-padded)

    # ---------------- reconstruction distances (fused reductions) ----------------
    # Padded lanes of x and dec are zero, so sums over Dp equal sums over the real D.
    dot_ab = jnp.sum(x * dec, axis=1, keepdims=True)
    sq_a = jnp.sum(x * x, axis=1, keepdims=True)
    sq_b = jnp.sum(dec * dec, axis=1, keepdims=True)

    rsq_a = jax.lax.rsqrt(sq_a)                       # 1 / ||a||   (inf if ||a|| == 0)
    rsq_b = jax.lax.rsqrt(sq_b)                       # 1 / ||b||

    # cosine_similarity: dot / (max(||a||, 1e-8) * max(||b||, 1e-8))   (per-norm clamp)
    cos = dot_ab * jnp.minimum(rsq_a, 1e8) * jnp.minimum(rsq_b, 1e8)

    # relative euclidean distance: ||a-b|| / max(||a||, 1e-10), with the fused identity
    # ||a-b||^2 = ||a||^2 + ||b||^2 - 2<a,b>  (clamped to >= 0 against cancellation).
    d2 = jnp.maximum(sq_a + sq_b - 2.0 * dot_ab, 0.0)
    euc = jnp.sqrt(d2) * jnp.minimum(rsq_a, 1e10)

    # ---------------- pack z into the lane-dense output slab ----------------
    slab_out[...] = jnp.zeros_like(slab_out)
    slab_out[:, :E] = enc
    slab_out[:, E:E + 1] = euc
    slab_out[:, E + 1:E + 2] = cos

    # ---------------- estimation network on the 128-lane padded z ----------------
    # sw1 rows >= E+2 are zero, so zp @ sw1_p == z @ sw1 exactly.
    zp = slab_out[...]
    h_est = jnp.tanh(
        jnp.dot(zp, sw1_ref[...], preferred_element_type=jnp.float32) + sb1_ref[...]
    )
    logits = jnp.dot(h_est, sw2_ref[...], preferred_element_type=jnp.float32) + sb2_ref[...]

    # softmax(dim=1); denominator reciprocal on the EUP.
    m = jnp.max(logits, axis=1, keepdims=True)
    e = jnp.exp(logits - m)
    gamma = e * pl.reciprocal(jnp.sum(e, axis=1, keepdims=True), approx=True)
    slab_out[:, E + 2:E + 2 + NG] = gamma


@functools.partial(jax.jit, static_argnames=("tile_b",))
def dagmm_forward(x, params, *, tile_b=512):
    B, D = x.shape
    H = params["ew1"].shape[1]
    E = params["ew2"].shape[1]
    HE = params["sw1"].shape[1]
    NG = params["sw2"].shape[1]
    Z = E + 2

    Dp = _round_up(D, 128)            # lane-dense input / reconstruction width
    SLAB_W = _round_up(Z + NG, 128)   # packed [enc | euc | cos | gamma] width
    TILE_B = min(tile_b, _round_up(B, 8))
    Bp = _round_up(B, TILE_B)
    grid = (Bp // TILE_B,)

    f32 = jnp.float32
    # zero-pad to lane-aligned widths (numerically exact: padded rows/cols are 0)
    x_p = jnp.zeros((Bp, Dp), f32).at[:B, :D].set(x.astype(f32))
    ew1_p = jnp.zeros((Dp, H), f32).at[:D, :].set(params["ew1"])
    dw2_p = jnp.zeros((H, Dp), f32).at[:, :D].set(params["dw2"])
    db2_p = jnp.zeros((1, Dp), f32).at[:, :D].set(params["db2"])
    sw1_p = jnp.zeros((SLAB_W, HE), f32).at[:Z, :].set(params["sw1"])

    weights = (
        ew1_p, params["eb1"], params["ew2"], params["eb2"],
        params["dw1"], params["db1"], dw2_p, db2_p,
        sw1_p, params["sb1"], params["sw2"], params["sb2"],
    )

    def resident(w):
        # full-array block, kept VMEM-resident across all batch tiles
        return pl.BlockSpec(w.shape, lambda i: (0,) * w.ndim)

    in_specs = [pl.BlockSpec((TILE_B, Dp), lambda i: (i, 0))] + [resident(w) for w in weights]
    out_specs = (
        pl.BlockSpec((TILE_B, Dp), lambda i: (i, 0)),       # dec (128-lane padded)
        pl.BlockSpec((TILE_B, SLAB_W), lambda i: (i, 0)),   # packed [enc|euc|cos|gamma]
    )
    out_shape = (
        jax.ShapeDtypeStruct((Bp, Dp), f32),
        jax.ShapeDtypeStruct((Bp, SLAB_W), f32),
    )

    kernel = functools.partial(dagmm_forward_kernel, E=E, NG=NG)
    dec_p, slab = pl.pallas_call(
        kernel,
        grid=grid,
        in_specs=in_specs,
        out_specs=out_specs,
        out_shape=out_shape,
        compiler_params=pltpu.CompilerParams(
            dimension_semantics=("parallel",),      # megacore sharding on v7x; no-op on v5e/v6e
            vmem_limit_bytes=32 * 1024 * 1024,      # headroom even on v7x's 64 MiB VMEM
        ),
    )(x_p, *weights)

    dec = dec_p[:B, :D]
    enc = slab[:B, :E]
    z = slab[:B, :Z]
    gamma = slab[:B, Z:Z + NG]
    return enc, dec, z, gamma


def init_params(key, D, H, E, hidden_est, n_gmm):
    """Deterministic small-scale parameter init (Linear weights stored as (in, out))."""
    keys = jax.random.split(key, 6)

    def lin(k, fan_in, fan_out):
        return jax.random.normal(k, (fan_in, fan_out), jnp.float32) * 0.1

    Z = E + 2
    return {
        # encoder: Linear(D, H) -> Tanh -> Linear(H, E)
        "ew1": lin(keys[0], D, H), "eb1": jnp.zeros((1, H), jnp.float32),
        "ew2": lin(keys[1], H, E), "eb2": jnp.zeros((1, E), jnp.float32),
        # decoder: Linear(E, H) -> Tanh -> Linear(H, D)
        "dw1": lin(keys[2], E, H), "db1": jnp.zeros((1, H), jnp.float32),
        "dw2": lin(keys[3], H, D), "db2": jnp.zeros((1, D), jnp.float32),
        # estimation: Linear(Z, hidden_est) -> Tanh -> Linear(hidden_est, n_gmm) -> Softmax
        "sw1": lin(keys[4], Z, hidden_est), "sb1": jnp.zeros((1, hidden_est), jnp.float32),
        "sw2": lin(keys[5], hidden_est, n_gmm), "sb2": jnp.zeros((1, n_gmm), jnp.float32),
    }


def reference_forward(x, p):
    """Pure-JAX reference of the module's forward() math."""
    h = jnp.tanh(x @ p["ew1"] + p["eb1"])
    enc = h @ p["ew2"] + p["eb2"]
    hd = jnp.tanh(enc @ p["dw1"] + p["db1"])
    dec = hd @ p["dw2"] + p["db2"]
    a, b = x, dec
    na = jnp.linalg.norm(a, axis=1, keepdims=True)
    nb = jnp.linalg.norm(b, axis=1, keepdims=True)
    cos = jnp.sum(a * b, axis=1, keepdims=True) / (jnp.maximum(na, 1e-8) * jnp.maximum(nb, 1e-8))
    euc = jnp.linalg.norm(a - b, axis=1, keepdims=True) / jnp.maximum(na, 1e-10)
    z = jnp.concatenate([enc, euc, cos], axis=1)
    he = jnp.tanh(z @ p["sw1"] + p["sb1"])
    gamma = jax.nn.softmax(he @ p["sw2"] + p["sb2"], axis=1)
    return enc, dec, z, gamma


if __name__ == "__main__":
    # Small shapes consistent with the module:
    #   batch B=8, flat input dim D=16, AE hidden H=32,
    #   encoder latent E=6 => DAGMM latent_dim Z = E + 2 = 8,
    #   estimation hidden = 10 (fixed in the module), n_gmm = 4.
    B, D, H, E, HIDDEN_EST, N_GMM = 8, 16, 32, 6, 10, 4

    key = jax.random.PRNGKey(0)
    k_x, k_p, k_x2 = jax.random.split(key, 3)
    x = jax.random.normal(k_x, (B, D), jnp.float32)
    params = init_params(k_p, D, H, E, HIDDEN_EST, N_GMM)

    enc, dec, z, gamma = dagmm_forward(x, params)
    jax.block_until_ready((enc, dec, z, gamma))

    r_enc, r_dec, r_z, r_gamma = reference_forward(x, params)
    assert jnp.allclose(enc, r_enc, atol=1e-4, rtol=1e-4), "enc mismatch"
    assert jnp.allclose(dec, r_dec, atol=1e-4, rtol=1e-4), "dec mismatch"
    assert jnp.allclose(z, r_z, atol=2e-4, rtol=2e-4), "z mismatch"
    assert jnp.allclose(gamma, r_gamma, atol=5e-3, rtol=5e-3), "gamma mismatch"

    # Second check: batch larger than one tile and NOT a multiple of TILE_B
    # (exercises the grid, weight residency and batch padding/slicing paths).
    B2 = 300
    x2 = jax.random.normal(k_x2, (B2, D), jnp.float32)
    enc2, dec2, z2, gamma2 = dagmm_forward(x2, params, tile_b=128)
    jax.block_until_ready((enc2, dec2, z2, gamma2))
    r_enc2, r_dec2, r_z2, r_gamma2 = reference_forward(x2, params)
    assert jnp.allclose(enc2, r_enc2, atol=1e-4, rtol=1e-4), "enc2 mismatch"
    assert jnp.allclose(dec2, r_dec2, atol=1e-4, rtol=1e-4), "dec2 mismatch"
    assert jnp.allclose(z2, r_z2, atol=2e-4, rtol=2e-4), "z2 mismatch"
    assert jnp.allclose(gamma2, r_gamma2, atol=5e-3, rtol=5e-3), "gamma2 mismatch"

    print("KERNEL_OK")
</pallas_src>

<mosaic_0001>
module attributes {stable_mosaic.version = 11 : i64} {
  func.func @dagmm_forward_kernel(%arg0: i32, %arg1: memref<8x128xf32, #tpu.memory_space<vmem>>, %arg2: memref<128x32xf32, #tpu.memory_space<vmem>>, %arg3: memref<1x32xf32, #tpu.memory_space<vmem>>, %arg4: memref<32x6xf32, #tpu.memory_space<vmem>>, %arg5: memref<1x6xf32, #tpu.memory_space<vmem>>, %arg6: memref<6x32xf32, #tpu.memory_space<vmem>>, %arg7: memref<1x32xf32, #tpu.memory_space<vmem>>, %arg8: memref<32x128xf32, #tpu.memory_space<vmem>>, %arg9: memref<1x128xf32, #tpu.memory_space<vmem>>, %arg10: memref<128x10xf32, #tpu.memory_space<vmem>>, %arg11: memref<1x10xf32, #tpu.memory_space<vmem>>, %arg12: memref<10x4xf32, #tpu.memory_space<vmem>>, %arg13: memref<1x4xf32, #tpu.memory_space<vmem>>, %arg14: memref<8x128xf32, #tpu.memory_space<vmem>>, %arg15: memref<8x128xf32, #tpu.memory_space<vmem>>) attributes {dimension_semantics = [#tpu.dimension_semantics<parallel>], iteration_bounds = array<i64: 1>, scalar_prefetch = 0 : i64, scratch_operands = 0 : i64, tpu.core_type = #tpu.core_type<tc>, window_params = [{transform_indices = @transform_0, window_bounds = array<i64: 8, 128>}, {pipeline_mode = #tpu.pipeline_mode<synchronous>, transform_indices = @transform_1, window_bounds = array<i64: 128, 32>}, {pipeline_mode = #tpu.pipeline_mode<synchronous>, transform_indices = @transform_2, window_bounds = array<i64: 1, 32>}, {pipeline_mode = #tpu.pipeline_mode<synchronous>, transform_indices = @transform_3, window_bounds = array<i64: 32, 6>}, {pipeline_mode = #tpu.pipeline_mode<synchronous>, transform_indices = @transform_4, window_bounds = array<i64: 1, 6>}, {pipeline_mode = #tpu.pipeline_mode<synchronous>, transform_indices = @transform_5, window_bounds = array<i64: 6, 32>}, {pipeline_mode = #tpu.pipeline_mode<synchronous>, transform_indices = @transform_6, window_bounds = array<i64: 1, 32>}, {pipeline_mode = #tpu.pipeline_mode<synchronous>, transform_indices = @transform_7, window_bounds = array<i64: 32, 128>}, {pipeline_mode = #tpu.pipeline_mode<synchronous>, transform_indices = @transform_8, window_bounds = array<i64: 1, 128>}, {pipeline_mode = #tpu.pipeline_mode<synchronous>, transform_indices = @transform_9, window_bounds = array<i64: 128, 10>}, {pipeline_mode = #tpu.pipeline_mode<synchronous>, transform_indices = @transform_10, window_bounds = array<i64: 1, 10>}, {pipeline_mode = #tpu.pipeline_mode<synchronous>, transform_indices = @transform_11, window_bounds = array<i64: 10, 4>}, {pipeline_mode = #tpu.pipeline_mode<synchronous>, transform_indices = @transform_12, window_bounds = array<i64: 1, 4>}, {transform_indices = @transform_13, window_bounds = array<i64: 8, 128>}, {transform_indices = @transform_14, window_bounds = array<i64: 8, 128>}]} {
    %c0 = arith.constant 0 : index
    %c0_0 = arith.constant 0 : index
    %0 = vector.load %arg1[%c0, %c0_0] : memref<8x128xf32, #tpu.memory_space<vmem>>, vector<8x128xf32>
    %c0_1 = arith.constant 0 : index
    %c0_2 = arith.constant 0 : index
    %1 = vector.load %arg2[%c0_1, %c0_2] : memref<128x32xf32, #tpu.memory_space<vmem>>, vector<128x32xf32>
    %cst = arith.constant dense<0.000000e+00> : vector<8x32xf32>
    %2 = tpu.matmul %0, %1, %cst {dimension_numbers = #tpu.dot_dimension_numbers<[1], [0], [0], [1], [0, 0, 1, 1], [], []>} : vector<8x128xf32>, vector<128x32xf32>, vector<8x32xf32> -> vector<8x32xf32>
    %c0_3 = arith.constant 0 : index
    %c0_4 = arith.constant 0 : index
    %3 = vector.load %arg3[%c0_3, %c0_4] : memref<1x32xf32, #tpu.memory_space<vmem>>, vector<1x32xf32>
    %4 = vector.broadcast %3 : vector<1x32xf32> to vector<8x32xf32>
    %5 = arith.addf %2, %4 : vector<8x32xf32>
    %6 = math.tanh %5 : vector<8x32xf32>
    %c0_5 = arith.constant 0 : index
    %c0_6 = arith.constant 0 : index
    %7 = vector.load %arg4[%c0_5, %c0_6] : memref<32x6xf32, #tpu.memory_space<vmem>>, vector<32x6xf32>
    %cst_7 = arith.constant dense<0.000000e+00> : vector<8x6xf32>
    %8 = tpu.matmul %6, %7, %cst_7 {dimension_numbers = #tpu.dot_dimension_numbers<[1], [0], [0], [1], [0, 0, 1, 1], [], []>} : vector<8x32xf32>, vector<32x6xf32>, vector<8x6xf32> -> vector<8x6xf32>
    %c0_8 = arith.constant 0 : index
    %c0_9 = arith.constant 0 : index
    %9 = vector.load %arg5[%c0_8, %c0_9] : memref<1x6xf32, #tpu.memory_space<vmem>>, vector<1x6xf32>
    %10 = vector.broadcast %9 : vector<1x6xf32> to vector<8x6xf32>
    %11 = arith.addf %8, %10 : vector<8x6xf32>
    %c0_10 = arith.constant 0 : index
    %c0_11 = arith.constant 0 : index
    %12 = vector.load %arg6[%c0_10, %c0_11] : memref<6x32xf32, #tpu.memory_space<vmem>>, vector<6x32xf32>
    %cst_12 = arith.constant dense<0.000000e+00> : vector<8x32xf32>
    %13 = tpu.matmul %11, %12, %cst_12 {dimension_numbers = #tpu.dot_dimension_numbers<[1], [0], [0], [1], [0, 0, 1, 1], [], []>} : vector<8x6xf32>, vector<6x32xf32>, vector<8x32xf32> -> vector<8x32xf32>
    %c0_13 = arith.constant 0 : index
    %c0_14 = arith.constant 0 : index
    %14 = vector.load %arg7[%c0_13, %c0_14] : memref<1x32xf32, #tpu.memory_space<vmem>>, vector<1x32xf32>
    %15 = vector.broadcast %14 : vector<1x32xf32> to vector<8x32xf32>
    %16 = arith.addf %13, %15 : vector<8x32xf32>
    %17 = math.tanh %16 : vector<8x32xf32>
    %c0_15 = arith.constant 0 : index
    %c0_16 = arith.constant 0 : index
    %18 = vector.load %arg8[%c0_15, %c0_16] : memref<32x128xf32, #tpu.memory_space<vmem>>, vector<32x128xf32>
    %cst_17 = arith.constant dense<0.000000e+00> : vector<8x128xf32>
    %19 = tpu.matmul %17, %18, %cst_17 {dimension_numbers = #tpu.dot_dimension_numbers<[1], [0], [0], [1], [0, 0, 1, 1], [], []>} : vector<8x32xf32>, vector<32x128xf32>, vector<8x128xf32> -> vector<8x128xf32>
    %c0_18 = arith.constant 0 : index
    %c0_19 = arith.constant 0 : index
    %20 = vector.load %arg9[%c0_18, %c0_19] : memref<1x128xf32, #tpu.memory_space<vmem>>, vector<1x128xf32>
    %21 = vector.broadcast %20 : vector<1x128xf32> to vector<8x128xf32>
    %22 = arith.addf %19, %21 : vector<8x128xf32>
    %c0_20 = arith.constant 0 : index
    %c0_21 = arith.constant 0 : index
    %23 = vector.load %arg14[%c0_20, %c0_21] : memref<8x128xf32, #tpu.memory_space<vmem>>, vector<8x128xf32>
    tpu.vector_store %arg14[%c0_20, %c0_21], %22 {strides = array<i32>} : memref<8x128xf32, #tpu.memory_space<vmem>>, vector<8x128xf32>,
    %24 = arith.mulf %0, %22 : vector<8x128xf32>
    %cst_22 = arith.constant dense<0.000000e+00> : vector<8xf32>
    %25 = vector.multi_reduction <add>, %24, %cst_22 [1] : vector<8x128xf32> to vector<8xf32>
    %26 = vector.shape_cast %25 : vector<8xf32> to vector<8x1xf32>
    %27 = arith.mulf %0, %0 : vector<8x128xf32>
    %cst_23 = arith.constant dense<0.000000e+00> : vector<8xf32>
    %28 = vector.multi_reduction <add>, %27, %cst_23 [1] : vector<8x128xf32> to vector<8xf32>
    %29 = vector.shape_cast %28 : vector<8xf32> to vector<8x1xf32>
    %30 = arith.mulf %22, %22 : vector<8x128xf32>
    %cst_24 = arith.constant dense<0.000000e+00> : vector<8xf32>
    %31 = vector.multi_reduction <add>, %30, %cst_24 [1] : vector<8x128xf32> to vector<8xf32>
    %32 = vector.shape_cast %31 : vector<8xf32> to vector<8x1xf32>
    %33 = math.rsqrt %29 : vector<8x1xf32>
    %34 = math.rsqrt %32 : vector<8x1xf32>
    %cst_25 = arith.constant 1.000000e+08 : f32
    %35 = vector.broadcast %cst_25 : f32 to vector<8x1xf32>
    %36 = arith.minimumf %33, %35 : vector<8x1xf32>
    %37 = arith.mulf %26, %36 : vector<8x1xf32>
    %cst_26 = arith.constant 1.000000e+08 : f32
    %38 = vector.broadcast %cst_26 : f32 to vector<8x1xf32>
    %39 = arith.minimumf %34, %38 : vector<8x1xf32>
    %40 = arith.mulf %37, %39 : vector<8x1xf32>
    %41 = arith.addf %29, %32 : vector<8x1xf32>
    %cst_27 = arith.constant 2.000000e+00 : f32
    %42 = vector.broadcast %cst_27 : f32 to vector<8x1xf32>
    %43 = arith.mulf %42, %26 : vector<8x1xf32>
    %44 = arith.subf %41, %43 : vector<8x1xf32>
    %cst_28 = arith.constant 0.000000e+00 : f32
    %45 = vector.broadcast %cst_28 : f32 to vector<8x1xf32>
    %46 = arith.maximumf %44, %45 : vector<8x1xf32>
    %47 = math.sqrt %46 : vector<8x1xf32>
    %cst_29 = arith.constant 1.000000e+10 : f32
    %48 = vector.broadcast %cst_29 : f32 to vector<8x1xf32>
    %49 = arith.minimumf %33, %48 : vector<8x1xf32>
    %50 = arith.mulf %47, %49 : vector<8x1xf32>
    %cst_30 = arith.constant 0.000000e+00 : f32
    %51 = vector.broadcast %cst_30 : f32 to vector<8x128xf32>
    %c0_31 = arith.constant 0 : index
    %c0_32 = arith.constant 0 : index
    %52 = vector.load %arg15[%c0_31, %c0_32] : memref<8x128xf32, #tpu.memory_space<vmem>>, vector<8x128xf32>
    tpu.vector_store %arg15[%c0_31, %c0_32], %51 {strides = array<i32>} : memref<8x128xf32, #tpu.memory_space<vmem>>, vector<8x128xf32>,
    %c0_33 = arith.constant 0 : index
    %c0_34 = arith.constant 0 : index
    %53 = vector.load %arg15[%c0_33, %c0_34] : memref<8x128xf32, #tpu.memory_space<vmem>>, vector<8x6xf32>
    tpu.vector_store %arg15[%c0_33, %c0_34], %11 {strides = array<i32>} : memref<8x128xf32, #tpu.memory_space<vmem>>, vector<8x6xf32>,
    %c0_35 = arith.constant 0 : index
    %c6 = arith.constant 6 : index
    %54 = vector.load %arg15[%c0_35, %c6] : memref<8x128xf32, #tpu.memory_space<vmem>>, vector<8x1xf32>
    tpu.vector_store %arg15[%c0_35, %c6], %50 {strides = array<i32>} : memref<8x128xf32, #tpu.memory_space<vmem>>, vector<8x1xf32>,
    %c0_36 = arith.constant 0 : index
    %c7 = arith.constant 7 : index
    %55 = vector.load %arg15[%c0_36, %c7] : memref<8x128xf32, #tpu.memory_space<vmem>>, vector<8x1xf32>
    tpu.vector_store %arg15[%c0_36, %c7], %40 {strides = array<i32>} : memref<8x128xf32, #tpu.memory_space<vmem>>, vector<8x1xf32>,
    %c0_37 = arith.constant 0 : index
    %c0_38 = arith.constant 0 : index
    %56 = vector.load %arg15[%c0_37, %c0_38] : memref<8x128xf32, #tpu.memory_space<vmem>>, vector<8x128xf32>
    %c0_39 = arith.constant 0 : index
    %c0_40 = arith.constant 0 : index
    %57 = vector.load %arg10[%c0_39, %c0_40] : memref<128x10xf32, #tpu.memory_space<vmem>>, vector<128x10xf32>
    %cst_41 = arith.constant dense<0.000000e+00> : vector<8x10xf32>
    %58 = tpu.matmul %56, %57, %cst_41 {dimension_numbers = #tpu.dot_dimension_numbers<[1], [0], [0], [1], [0, 0, 1, 1], [], []>} : vector<8x128xf32>, vector<128x10xf32>, vector<8x10xf32> -> vector<8x10xf32>
    %c0_42 = arith.constant 0 : index
    %c0_43 = arith.constant 0 : index
    %59 = vector.load %arg11[%c0_42, %c0_43] : memref<1x10xf32, #tpu.memory_space<vmem>>, vector<1x10xf32>
    %60 = vector.broadcast %59 : vector<1x10xf32> to vector<8x10xf32>
    %61 = arith.addf %58, %60 : vector<8x10xf32>
    %62 = math.tanh %61 : vector<8x10xf32>
    %c0_44 = arith.constant 0 : index
    %c0_45 = arith.constant 0 : index
    %63 = vector.load %arg12[%c0_44, %c0_45] : memref<10x4xf32, #tpu.memory_space<vmem>>, vector<10x4xf32>
    %cst_46 = arith.constant dense<0.000000e+00> : vector<8x4xf32>
    %64 = tpu.matmul %62, %63, %cst_46 {dimension_numbers = #tpu.dot_dimension_numbers<[1], [0], [0], [1], [0, 0, 1, 1], [], []>} : vector<8x10xf32>, vector<10x4xf32>, vector<8x4xf32> -> vector<8x4xf32>
    %c0_47 = arith.constant 0 : index
    %c0_48 = arith.constant 0 : index
    %65 = vector.load %arg13[%c0_47, %c0_48] : memref<1x4xf32, #tpu.memory_space<vmem>>, vector<1x4xf32>
    %66 = vector.broadcast %65 : vector<1x4xf32> to vector<8x4xf32>
    %67 = arith.addf %64, %66 : vector<8x4xf32>
    %cst_49 = arith.constant dense<0xFF800000> : vector<8xf32>
    %68 = vector.multi_reduction <maximumf>, %67, %cst_49 [1] : vector<8x4xf32> to vector<8xf32>
    %69 = vector.shape_cast %68 : vector<8xf32> to vector<8x1xf32>
    %70 = vector.broadcast %69 : vector<8x1xf32> to vector<8x4xf32>
    %71 = arith.subf %67, %70 : vector<8x4xf32>
    %72 = math.exp %71 : vector<8x4xf32>
    %cst_50 = arith.constant dense<0.000000e+00> : vector<8xf32>
    %73 = vector.multi_reduction <add>, %72, %cst_50 [1] : vector<8x4xf32> to vector<8xf32>
    %74 = vector.shape_cast %73 : vector<8xf32> to vector<8x1xf32>
    %75 = tpu.reciprocal %74 {approx = true} : vector<8x1xf32> -> vector<8x1xf32>
    %76 = vector.broadcast %75 : vector<8x1xf32> to vector<8x4xf32>
    %77 = arith.mulf %72, %76 : vector<8x4xf32>
    %c0_51 = arith.constant 0 : index
    %c8 = arith.constant 8 : index
    %78 = vector.load %arg15[%c0_51, %c8] : memref<8x128xf32, #tpu.memory_space<vmem>>, vector<8x4xf32>
    tpu.vector_store %arg15[%c0_51, %c8], %77 {strides = array<i32>} : memref<8x128xf32, #tpu.memory_space<vmem>>, vector<8x4xf32>,
    return
  }
  func.func @transform_0(%arg0: i32) -> (i32, i32) {
    %c0_i32 = arith.constant 0 : i32
    %c0_i32_0 = arith.constant 0 : i32
    return %arg0, %c0_i32 : i32, i32
  }
  func.func @transform_1(%arg0: i32) -> (i32, i32) {
    %c0_i32 = arith.constant 0 : i32
    %c0_i32_0 = arith.constant 0 : i32
    %c0_i32_1 = arith.constant 0 : i32
    return %c0_i32, %c0_i32_0 : i32, i32
  }
  func.func @transform_2(%arg0: i32) -> (i32, i32) {
    %c0_i32 = arith.constant 0 : i32
    %c0_i32_0 = arith.constant 0 : i32
    %c0_i32_1 = arith.constant 0 : i32
    return %c0_i32, %c0_i32_0 : i32, i32
  }
  func.func @transform_3(%arg0: i32) -> (i32, i32) {
    %c0_i32 = arith.constant 0 : i32
    %c0_i32_0 = arith.constant 0 : i32
    %c0_i32_1 = arith.constant 0 : i32
    return %c0_i32, %c0_i32_0 : i32, i32
  }
  func.func @transform_4(%arg0: i32) -> (i32, i32) {
    %c0_i32 = arith.constant 0 : i32
    %c0_i32_0 = arith.constant 0 : i32
    %c0_i32_1 = arith.constant 0 : i32
    return %c0_i32, %c0_i32_0 : i32, i32
  }
  func.func @transform_5(%arg0: i32) -> (i32, i32) {
    %c0_i32 = arith.constant 0 : i32
    %c0_i32_0 = arith.constant 0 : i32
    %c0_i32_1 = arith.constant 0 : i32
    return %c0_i32, %c0_i32_0 : i32, i32
  }
  func.func @transform_6(%arg0: i32) -> (i32, i32) {
    %c0_i32 = arith.constant 0 : i32
    %c0_i32_0 = arith.constant 0 : i32
    %c0_i32_1 = arith.constant 0 : i32
    return %c0_i32, %c0_i32_0 : i32, i32
  }
  func.func @transform_7(%arg0: i32) -> (i32, i32) {
    %c0_i32 = arith.constant 0 : i32
    %c0_i32_0 = arith.constant 0 : i32
    %c0_i32_1 = arith.constant 0 : i32
    return %c0_i32, %c0_i32_0 : i32, i32
  }
  func.func @transform_8(%arg0: i32) -> (i32, i32) {
    %c0_i32 = arith.constant 0 : i32
    %c0_i32_0 = arith.constant 0 : i32
    %c0_i32_1 = arith.constant 0 : i32
    return %c0_i32, %c0_i32_0 : i32, i32
  }
  func.func @transform_9(%arg0: i32) -> (i32, i32) {
    %c0_i32 = arith.constant 0 : i32
    %c0_i32_0 = arith.constant 0 : i32
    %c0_i32_1 = arith.constant 0 : i32
    return %c0_i32, %c0_i32_0 : i32, i32
  }
  func.func @transform_10(%arg0: i32) -> (i32, i32) {
    %c0_i32 = arith.constant 0 : i32
    %c0_i32_0 = arith.constant 0 : i32
    %c0_i32_1 = arith.constant 0 : i32
    return %c0_i32, %c0_i32_0 : i32, i32
  }
  func.func @transform_11(%arg0: i32) -> (i32, i32) {
    %c0_i32 = arith.constant 0 : i32
    %c0_i32_0 = arith.constant 0 : i32
    %c0_i32_1 = arith.constant 0 : i32
    return %c0_i32, %c0_i32_0 : i32, i32
  }
  func.func @transform_12(%arg0: i32) -> (i32, i32) {
    %c0_i32 = arith.constant 0 : i32
    %c0_i32_0 = arith.constant 0 : i32
    %c0_i32_1 = arith.constant 0 : i32
    return %c0_i32, %c0_i32_0 : i32, i32
  }
  func.func @transform_13(%arg0: i32) -> (i32, i32) {
    %c0_i32 = arith.constant 0 : i32
    %c0_i32_0 = arith.constant 0 : i32
    return %arg0, %c0_i32 : i32, i32
  }
  func.func @transform_14(%arg0: i32) -> (i32, i32) {
    %c0_i32 = arith.constant 0 : i32
    %c0_i32_0 = arith.constant 0 : i32
    return %arg0, %c0_i32 : i32, i32
  }
}

</mosaic_0001>

<llo_original>
// kernel: dagmm_forward.1
$region0: #{dagmm_forward.1}
  #allocation0 [shape = 'u32[]', space=smem, size = 0x4, offset = 0x4, fixed_abs, tag = 'smem constant byte address 0x4 - core index']
  #allocation1 [shape = 'u32[72,128]{1,0:T(1,128)}', space=vmem, size = 0x9000, scoped, tag = 'internal scratch']
  %s0 = inlined_call_operand.vmem [shape: f32[8,128], index: 0, kind: input, shape index: {}]
  %s1 = inlined_call_operand.vmem [shape: f32[128,32], index: 1, kind: input, shape index: {}]
  %s2 = inlined_call_operand.vmem [shape: f32[1,32], index: 2, kind: input, shape index: {}]
  %s3 = inlined_call_operand.vmem [shape: f32[32,6], index: 3, kind: input, shape index: {}]
  %s4 = inlined_call_operand.vmem [shape: f32[1,6], index: 4, kind: input, shape index: {}]
  %s5 = inlined_call_operand.vmem [shape: f32[6,32], index: 5, kind: input, shape index: {}]
  %s6 = inlined_call_operand.vmem [shape: f32[1,32], index: 6, kind: input, shape index: {}]
  %s7 = inlined_call_operand.vmem [shape: f32[32,128], index: 7, kind: input, shape index: {}]
  %s8 = inlined_call_operand.vmem [shape: f32[1,128], index: 8, kind: input, shape index: {}]
  %s9 = inlined_call_operand.vmem [shape: f32[128,10], index: 9, kind: input, shape index: {}]
  %s10 = inlined_call_operand.vmem [shape: f32[1,10], index: 10, kind: input, shape index: {}]
  %s11 = inlined_call_operand.vmem [shape: f32[10,4], index: 11, kind: input, shape index: {}]
  %s12 = inlined_call_operand.vmem [shape: f32[1,4], index: 12, kind: input, shape index: {}]
  %s13 = inlined_call_operand.hbm [shape: f32[8,128], index: 13, kind: output, shape index: {0}]
  %s14 = inlined_call_operand.vmem [shape: f32[8,128], index: 14, kind: output, shape index: {1}]
  %15 = xla_tuple %s13, %s14
  %s16 = sld [smem:[#allocation0]]
  $region70: #{dagmm_forward.1} parent=0
    _
  %s18 = ssub.s32 1, %s16
  %s19 = scalar_select 0, %s18, %s16
  $region1: #{dagmm_forward.1} parent=0
    #allocation2 [shape = 'u8[4096]{0}', space=vmem, size = 0x1000, scoped, tag = 'output window, operand 0, single buffered']
    #allocation3 [shape = 's32[1]{0}', space=sflag, size = 0x4, scoped, tag = 'scoped memory for dagmm_forward.1']
    %20 = vsyncpa [#allocation3], 0
    // Predicated region
    $region2: #{dagmm_forward.1} parent=1 // pred_check
      _
    $region3: #{dagmm_forward.1} parent=1 // pred_check_branch
      %22 = sbr.rel (0) target = $region5
    $region4: #{dagmm_forward.1} parent=1 // pred_region
      _
    $region5: #{dagmm_forward.1} parent=1 // pred_fallthru
      _
    // Predicated region
    $region6: #{dagmm_forward.1} parent=1 // pred_check
      _
    $region7: #{dagmm_forward.1} parent=1 // pred_check_branch
      %24 = sbr.rel (0) target = $region9
    $region8: #{dagmm_forward.1} parent=1 // pred_region
      _
    $region9: #{dagmm_forward.1} parent=1 // pred_fallthru
      _
    // Predicated region
    $region10: #{dagmm_forward.1} parent=1 // pred_check
      _
    $region11: #{dagmm_forward.1} parent=1 // pred_check_branch
      %26 = sbr.rel (0) target = $region13
    $region12: #{dagmm_forward.1} parent=1 // pred_region
      _
    $region13: #{dagmm_forward.1} parent=1 // pred_fallthru
      _
    // Predicated region
    $region14: #{dagmm_forward.1} parent=1 // pred_check
      _
    $region15: #{dagmm_forward.1} parent=1 // pred_check_branch
      %28 = sbr.rel (0) target = $region17
    $region16: #{dagmm_forward.1} parent=1 // pred_region
      _
    $region17: #{dagmm_forward.1} parent=1 // pred_fallthru
      _
    // Predicated region
    $region18: #{dagmm_forward.1} parent=1 // pred_check
      _
    $region19: #{dagmm_forward.1} parent=1 // pred_check_branch
      %30 = sbr.rel (0) target = $region21
    $region20: #{dagmm_forward.1} parent=1 // pred_region
      _
    $region21: #{dagmm_forward.1} parent=1 // pred_fallthru
      _
    // Predicated region
    $region22: #{dagmm_forward.1} parent=1 // pred_check
      _
    $region23: #{dagmm_forward.1} parent=1 // pred_check_branch
      %32 = sbr.rel (0) target = $region25
    $region24: #{dagmm_forward.1} parent=1 // pred_region
      _
    $region25: #{dagmm_forward.1} parent=1 // pred_fallthru
      _
    // Predicated region
    $region26: #{dagmm_forward.1} parent=1 // pred_check
      _
    $region27: #{dagmm_forward.1} parent=1 // pred_check_branch
      %34 = sbr.rel (0) target = $region29
    $region28: #{dagmm_forward.1} parent=1 // pred_region
      _
    $region29: #{dagmm_forward.1} parent=1 // pred_fallthru
      _
    // Predicated region
    $region30: #{dagmm_forward.1} parent=1 // pred_check
      _
    $region31: #{dagmm_forward.1} parent=1 // pred_check_branch
      %36 = sbr.rel (0) target = $region33
    $region32: #{dagmm_forward.1} parent=1 // pred_region
      _
    $region33: #{dagmm_forward.1} parent=1 // pred_fallthru
      _
    // Predicated region
    $region34: #{dagmm_forward.1} parent=1 // pred_check
      _
    $region35: #{dagmm_forward.1} parent=1 // pred_check_branch
      %38 = sbr.rel (0) target = $region37
    $region36: #{dagmm_forward.1} parent=1 // pred_region
      _
    $region37: #{dagmm_forward.1} parent=1 // pred_fallthru
      _
    // Predicated region
    $region38: #{dagmm_forward.1} parent=1 // pred_check
      _
    $region39: #{dagmm_forward.1} parent=1 // pred_check_branch
      %40 = sbr.rel (0) target = $region41
    $region40: #{dagmm_forward.1} parent=1 // pred_region
      _
    $region41: #{dagmm_forward.1} parent=1 // pred_fallthru
      _
    // Predicated region
    $region42: #{dagmm_forward.1} parent=1 // pred_check
      _
    $region43: #{dagmm_forward.1} parent=1 // pred_check_branch
      %42 = sbr.rel (0) target = $region45
    $region44: #{dagmm_forward.1} parent=1 // pred_region
      _
    $region45: #{dagmm_forward.1} parent=1 // pred_fallthru
      _
    // Predicated region
    $region46: #{dagmm_forward.1} parent=1 // pred_check
      _
    $region47: #{dagmm_forward.1} parent=1 // pred_check_branch
      %44 = sbr.rel (0) target = $region49
    $region48: #{dagmm_forward.1} parent=1 // pred_region
      _
    $region49: #{dagmm_forward.1} parent=1 // pred_fallthru
      _
    // Predicated region
    $region50: #{dagmm_forward.1} parent=1 // pred_check
      _
    $region51: #{dagmm_forward.1} parent=1 // pred_check_branch
      %46 = sbr.rel (0) target = $region53
    $region52: #{dagmm_forward.1} parent=1 // pred_region
      _
    $region53: #{dagmm_forward.1} parent=1 // pred_fallthru
      _
    %v47 = vld [vmem:[%s0] sm:$0xff]
    %v48 = vld [vmem:[%s1] sm:$0xff]
    %v49 = vld [vmem:[%s1 + $0x8] sm:$0xff]
    %v50 = vld [vmem:[%s1 + $0x10] sm:$0xff]
    %v51 = vld [vmem:[%s1 + $0x18] sm:$0xff]
    %v52 = vld [vmem:[%s1 + $0x20] sm:$0xff]
    %v53 = vld [vmem:[%s1 + $0x28] sm:$0xff]
    %v54 = vld [vmem:[%s1 + $0x30] sm:$0xff]
    %v55 = vld [vmem:[%s1 + $0x38] sm:$0xff]
    %v56 = vld [vmem:[%s1 + $0x40] sm:$0xff]
    %v57 = vld [vmem:[%s1 + $0x48] sm:$0xff]
    %v58 = vld [vmem:[%s1 + $0x50] sm:$0xff]
    %v59 = vld [vmem:[%s1 + $0x58] sm:$0xff]
    %v60 = vld [vmem:[%s1 + $0x60] sm:$0xff]
    %v61 = vld [vmem:[%s1 + $0x68] sm:$0xff]
    %v62 = vld [vmem:[%s1 + $0x70] sm:$0xff]
    %v63 = vld [vmem:[%s1 + $0x78] sm:$0xff]
    %v64 = vld [vmem:[%s2] sm:$0x1]
    %v66 = vperm.slane %v64, 0
    %68 = vmatpush.msra.mxu0 %v63
    %69 = vmatpush.msra.mxu0 %v62
    %70 = vmatpush.msra.mxu0 %v61
    %71 = vmatpush.msra.mxu0 %v60
    %72 = vmatpush.msra.mxu0 %v59
    %73 = vmatpush.msra.mxu0 %v58
    %74 = vmatpush.msra.mxu0 %v57
    %75 = vmatpush.msra.mxu0 %v56
    %76 = vmatpush.msra.mxu0 %v55
    %77 = vmatpush.msra.mxu0 %v54
    %78 = vmatpush.msra.mxu0 %v53
    %79 = vmatpush.msra.mxu0 %v52
    %80 = vmatpush.msra.mxu0 %v51
    %81 = vmatpush.msra.mxu0 %v50
    %82 = vmatpush.msra.mxu0 %v49
    %83 = vmatpush.msra.mxu0 %v48
    %84 = vmatmul.f32.gmra.mxu0 %v47
    %v85 = vpop.f32.mrf.mxu0
    %v86 = vadd.f32 %v66, %v85
    %87 = vdwg.mxu0
    %v88 = vtanh.pop %v86
    %v89 = vld [vmem:[%s3] sm:$0xff]
    %v90 = vld [vmem:[%s3 + $0x8] sm:$0xff]
    %v91 = vld [vmem:[%s3 + $0x10] sm:$0xff]
    %v92 = vld [vmem:[%s3 + $0x18] sm:$0xff]
    %v93 = vld [vmem:[%s4] sm:$0x1]
    %v95 = vperm.slane %v93, 0
    %vm97 = vcmask 261120
    %v99 = vsel %vm97, %v88, 0
    %101 = vmatpush.msra.mxu0 0.0
    %102 = vmatpush.msra.mxu0 0.0
    %103 = vmatpush.msra.mxu0 0.0
    %104 = vmatpush.msra.mxu0 0.0
    %105 = vmatpush.msra.mxu0 0.0
    %106 = vmatpush.msra.mxu0 0.0
    %107 = vmatpush.msra.mxu0 0.0
    %108 = vmatpush.msra.mxu0 0.0
    %109 = vmatpush.msra.mxu0 0.0
    %110 = vmatpush.msra.mxu0 0.0
    %111 = vmatpush.msra.mxu0 0.0
    %112 = vmatpush.msra.mxu0 0.0
    %113 = vmatpush.msra.mxu0 %v92
    %114 = vmatpush.msra.mxu0 %v91
    %115 = vmatpush.msra.mxu0 %v90
    %116 = vmatpush.msra.mxu0 %v89
    %117 = vmatmul.f32.gmra.mxu0 %v99
    %v118 = vpop.f32.mrf.mxu0
    %v119 = vadd.f32 %v95, %v118
    %120 = vdwg.mxu0
    %v121 = vld [vmem:[%s5] sm:$0x3f]
    %v122 = vld [vmem:[%s6] sm:$0x1]
    %v124 = vperm.slane %v122, 0
    %vm126 = vcmask 48128
    %v128 = vsel %vm126, %v119, 0
    %vm130 = vcmask 1045504
    %v132 = vsel %vm130, %v121, 0
    %134 = vmatpush.msra.mxu0 0.0
    %135 = vmatpush.msra.mxu0 0.0
    %136 = vmatpush.msra.mxu0 0.0
    %137 = vmatpush.msra.mxu0 0.0
    %138 = vmatpush.msra.mxu0 0.0
    %139 = vmatpush.msra.mxu0 0.0
    %140 = vmatpush.msra.mxu0 0.0
    %141 = vmatpush.msra.mxu0 0.0
    %142 = vmatpush.msra.mxu0 0.0
    %143 = vmatpush.msra.mxu0 0.0
    %144 = vmatpush.msra.mxu0 0.0
    %145 = vmatpush.msra.mxu0 0.0
    %146 = vmatpush.msra.mxu0 0.0
    %147 = vmatpush.msra.mxu0 0.0
    %148 = vmatpush.msra.mxu0 0.0
    %149 = vmatpush.msra.mxu0 %v132
    %150 = vmatmul.f32.gmra.mxu0 %v128
    %v151 = vpop.f32.mrf.mxu0
    %v152 = vadd.f32 %v124, %v151
    %153 = vdwg.mxu0
    %v154 = vtanh.pop %v152
    %v155 = vld [vmem:[%s7] sm:$0xff]
    %v156 = vld [vmem:[%s7 + $0x8] sm:$0xff]
    %v157 = vld [vmem:[%s7 + $0x10] sm:$0xff]
    %v158 = vld [vmem:[%s7 + $0x18] sm:$0xff]
    %v159 = vld [vmem:[%s8] sm:$0x1]
    %v161 = vperm.slane %v159, 0
    %v164 = vsel %vm97, %v154, 0
    %166 = vmatpush.msra.mxu0 0.0
    %167 = vmatpush.msra.mxu0 0.0
    %168 = vmatpush.msra.mxu0 0.0
    %169 = vmatpush.msra.mxu0 0.0
    %170 = vmatpush.msra.mxu0 0.0
    %171 = vmatpush.msra.mxu0 0.0
    %172 = vmatpush.msra.mxu0 0.0
    %173 = vmatpush.msra.mxu0 0.0
    %174 = vmatpush.msra.mxu0 0.0
    %175 = vmatpush.msra.mxu0 0.0
    %176 = vmatpush.msra.mxu0 0.0
    %177 = vmatpush.msra.mxu0 0.0
    %178 = vmatpush.msra.mxu0 %v158
    %179 = vmatpush.msra.mxu0 %v157
    %180 = vmatpush.msra.mxu0 %v156
    %181 = vmatpush.msra.mxu0 %v155
    %182 = vmatmul.f32.gmra.mxu0 %v164
    %v183 = vpop.f32.mrf.mxu0
    %v184 = vadd.f32 %v161, %v183
    %185 = vdwg.mxu0
    %186 = vst [vmem:[#allocation2] sm:$0xff] %v184
    %v187 = vmul.f32 %v47, %v184
    %188 = vadd.xlane.f32.xlu0 %v187
    %v189 = vpop.xlane.xlu0 %188
    %v190 = vmul.f32 %v47, %v47
    %191 = vadd.xlane.f32.xlu0 %v190
    %v192 = vpop.xlane.xlu0 %191
    %v193 = vmul.f32 %v184, %v184
    %194 = vadd.xlane.f32.xlu0 %v193
    %v195 = vpop.xlane.xlu0 %194
    %v196 = vrsqrt.pop %v192
    %v197 = vmul.f32 %v196, %v192
    %v198 = vmul.f32 %v197, %v196
    %v199 = vmul.f32 0.5, %v198
    %v200 = vsub.f32 1.5, %v199
    %v201 = vmul.f32 %v196, %v200
    %vm202 = vweird.f32 %v192
    %vm203 = vweird.f32 %v196
    %vm204 = vmor %vm202, %vm203
    %v205 = vsel %vm204, %v196, %v201
    %v206 = vrsqrt.pop %v195
    %v207 = vmul.f32 %v206, %v195
    %v208 = vmul.f32 %v207, %v206
    %v209 = vmul.f32 0.5, %v208
    %v210 = vsub.f32 1.5, %v209
    %v211 = vmul.f32 %v206, %v210
    %vm212 = vweird.f32 %v195
    %vm213 = vweird.f32 %v206
    %vm214 = vmor %vm212, %vm213
    %v215 = vsel %vm214, %v206, %v211
    %v216 = vmin.f32 %v205, 1e+08
    %v217 = vmul.f32 %v189, %v216
    %v218 = vmin.f32 %v215, 1e+08
    %v219 = vmul.f32 %v217, %v218
    %v220 = vadd.f32 %v192, %v195
    %v221 = vmul.f32 %v189, 2.0
    %v222 = vsub.f32 %v220, %v221
    %v223 = vmax.f32 %v222, 0.0
    %v224 = vrsqrt.pop %v223
    %v225 = vmul.f32 %v224, %v223
    %v226 = vmul.f32 %v225, %v224
    %v227 = vmul.f32 0.5, %v226
    %v228 = vsub.f32 1.5, %v227
    %v229 = vmul.f32 %v224, %v228
    %v230 = vmul.f32 %v223, %v229
    %vm231 = vcmp.eq.f32.partialorder %v223, inf
    %v232 = vsel %vm231, %v223, %v230
    %vm233 = vcmp.eq.f32.partialorder %v223, 0.0
    %v234 = vand.u32 %v223, 2147483648
    %v235 = vsel %vm233, %v234, %v232
    %v236 = vmin.f32 %v205, 1e+10
    %v237 = vmul.f32 %v235, %v236
    %238 = vst [vmem:[%s14] sm:$0xff] 0.0
    %239 = vst.msk [vmem:[%s14] sm:$0xff] %vm126, %v119
    %vm240 = vcmask 56368
    %241 = vst.msk [vmem:[%s14] sm:$0xff] %vm240, %v237
    %vm242 = vcmask 64568
    %243 = vst.msk [vmem:[%s14] sm:$0xff] %vm242, %v219
    %v244 = vld [vmem:[%s14] sm:$0xff]
    %v245 = vld [vmem:[%s9] sm:$0xff]
    %v246 = vld [vmem:[%s9 + $0x8] sm:$0xff]
    %v247 = vld [vmem:[%s9 + $0x10] sm:$0xff]
    %v248 = vld [vmem:[%s9 + $0x18] sm:$0xff]
    %v249 = vld [vmem:[%s9 + $0x20] sm:$0xff]
    %v250 = vld [vmem:[%s9 + $0x28] sm:$0xff]
    %v251 = vld [vmem:[%s9 + $0x30] sm:$0xff]
    %v252 = vld [vmem:[%s9 + $0x38] sm:$0xff]
    %v253 = vld [vmem:[%s9 + $0x40] sm:$0xff]
    %v254 = vld [vmem:[%s9 + $0x48] sm:$0xff]
    %v255 = vld [vmem:[%s9 + $0x50] sm:$0xff]
    %v256 = vld [vmem:[%s9 + $0x58] sm:$0xff]
    %v257 = vld [vmem:[%s9 + $0x60] sm:$0xff]
    %v258 = vld [vmem:[%s9 + $0x68] sm:$0xff]
    %v259 = vld [vmem:[%s9 + $0x70] sm:$0xff]
    %v260 = vld [vmem:[%s9 + $0x78] sm:$0xff]
    %v261 = vld [vmem:[%s10] sm:$0x1]
    %v263 = vperm.slane %v261, 0
    %265 = vmatpush.msra.mxu0 %v260
    %266 = vmatpush.msra.mxu0 %v259
    %267 = vmatpush.msra.mxu0 %v258
    %268 = vmatpush.msra.mxu0 %v257
    %269 = vmatpush.msra.mxu0 %v256
    %270 = vmatpush.msra.mxu0 %v255
    %271 = vmatpush.msra.mxu0 %v254
    %272 = vmatpush.msra.mxu0 %v253
    %273 = vmatpush.msra.mxu0 %v252
    %274 = vmatpush.msra.mxu0 %v251
    %275 = vmatpush.msra.mxu0 %v250
    %276 = vmatpush.msra.mxu0 %v249
    %277 = vmatpush.msra.mxu0 %v248
    %278 = vmatpush.msra.mxu0 %v247
    %279 = vmatpush.msra.mxu0 %v246
    %280 = vmatpush.msra.mxu0 %v245
    %281 = vmatmul.f32.gmra.mxu0 %v244
    %v282 = vpop.f32.mrf.mxu0
    %v283 = vadd.f32 %v263, %v282
    %284 = vdwg.mxu0
    %v285 = vtanh.pop %v283
    %v286 = vld [vmem:[%s11] sm:$0xff]
    %v287 = vld [vmem:[%s11 + $0x8] sm:$0x3]
    %v288 = vld [vmem:[%s12] sm:$0x1]
    %v290 = vperm.slane %v288, 0
    %vm292 = vcmask 80896
    %v294 = vsel %vm292, %v285, 0
    %vm296 = vcmask 1041408
    %v298 = vsel %vm296, %v287, 0
    %300 = vmatpush.msra.mxu0 0.0
    %301 = vmatpush.msra.mxu0 0.0
    %302 = vmatpush.msra.mxu0 0.0
    %303 = vmatpush.msra.mxu0 0.0
    %304 = vmatpush.msra.mxu0 0.0
    %305 = vmatpush.msra.mxu0 0.0
    %306 = vmatpush.msra.mxu0 0.0
    %307 = vmatpush.msra.mxu0 0.0
    %308 = vmatpush.msra.mxu0 0.0
    %309 = vmatpush.msra.mxu0 0.0
    %310 = vmatpush.msra.mxu0 0.0
    %311 = vmatpush.msra.mxu0 0.0
    %312 = vmatpush.msra.mxu0 0.0
    %313 = vmatpush.msra.mxu0 0.0
    %314 = vmatpush.msra.mxu0 %v298
    %315 = vmatpush.msra.mxu0 %v286
    %316 = vmatmul.f32.gmra.mxu0 %v294
    %v317 = vpop.f32.mrf.mxu0
    %v318 = vadd.f32 %v290, %v317
    %319 = vdwg.mxu0
    %vm320 = vcmask 31744
    %v321 = vsel %vm320, %v318, -inf
    %322 = vmax.xlane.f32.xlu0 %v321
    %v323 = vpop.xlane.xlu0 %322
    %v324 = vsub.f32 %v318, %v323
    %v325 = vmul.f32 %v324, 1.442695
    %v326 = vpow.pop %v325
    %v327 = vsel %vm320, %v326, 0.0
    %328 = vadd.xlane.f32.xlu0 %v327
    %v329 = vpop.xlane.xlu0 %328
    %v330 = vrcp.pop %v329
    %v331 = vmul.f32 %v326, %v330
    %333 = vrot.lane.b32.xlu0 %v331, 8
    %v334 = vpop.permute.xlu0 %333
    %vm336 = vcmask 97344
    %337 = vst.msk [vmem:[%s14] sm:$0xff] %vm336, %v334
    // Predicated region
    $region54: #{dagmm_forward.1} parent=1 // pred_check
      _
    $region55: #{dagmm_forward.1} parent=1 // pred_check_branch
      %339 = sbr.rel (0) target = $region57
    $region56: #{dagmm_forward.1} parent=1 // pred_region
      %341 = vsyncadd [#allocation3], 0
      %s343 = sshll.u32 [#allocation2], 4
      %s344 = int_to_ptr.vmem [resolvable:$true] %s343
      %s345 = sshll.u32 %s13, 4
      %s346 = int_to_ptr.hbm [resolvable:$true] %s345
      %348 = dma.vmem_to_hbm [thread:$0]  %s344, 128, %s346, [#allocation3]
    $region57: #{dagmm_forward.1} parent=1 // pred_fallthru
      _
    // Predicated region
    $region58: #{dagmm_forward.1} parent=1 // pred_check
      _
    $region59: #{dagmm_forward.1} parent=1 // pred_check_branch
      %350 = sbr.rel (0) target = $region61
    $region60: #{dagmm_forward.1} parent=1 // pred_region
      _
    $region61: #{dagmm_forward.1} parent=1 // pred_fallthru
      _
    // Predicated region
    $region62: #{dagmm_forward.1} parent=1 // pred_check
      _
    $region63: #{dagmm_forward.1} parent=1 // pred_check_branch
      %352 = sbr.rel (0) target = $region65
    $region64: #{dagmm_forward.1} parent=1 // pred_region
      %354 = dma.done [#allocation3], 128
    $region65: #{dagmm_forward.1} parent=1 // pred_fallthru
      _
    // Predicated region
    $region66: #{dagmm_forward.1} parent=1 // pred_check
      _
    $region67: #{dagmm_forward.1} parent=1 // pred_check_branch
      %356 = sbr.rel (0) target = $region69
    $region68: #{dagmm_forward.1} parent=1 // pred_region
      _
    $region69: #{dagmm_forward.1} parent=1 // pred_fallthru
      _
    %357 = vsyncpa [#allocation3], 1

</llo_original>
